<compile_context>
chip_gen: v7x
topology: tpu7x:2x2x1
jax: 0.10.0
libtpu: 0.0.40
codegen_flags: <defaults>
</compile_context>

<pallas_src>
import math

import jax
import jax.numpy as jnp
from jax.experimental import pallas as pl
from jax.experimental.pallas import tpu as pltpu


def _rte_kernel(t_ref, x_ref, table_ref, o_ref):
    """t_ref: (TILE_N, 1) int32, x_ref: (TILE_N, H), table_ref: (max_len, H)
    (resident, already projected through the Linear), o_ref: (TILE_N, H)."""
    rows = t_ref.shape[0]
    max_len = table_ref.shape[0]

    # Exact one-hot gather of the pre-projected table rows on the MXU.
    positions = jax.lax.broadcasted_iota(jnp.int32, (rows, max_len), 1)
    onehot = (t_ref[...] == positions).astype(table_ref.dtype)      # {0.0, 1.0}
    gathered = jnp.dot(onehot, table_ref[...],
                       preferred_element_type=jnp.float32)          # (rows, H)

    o_ref[...] = (x_ref[...] + gathered).astype(o_ref.dtype)


def rel_temporal_encoding(x, t, proj_table, *, tile_n=512):
    """x: [N, H] float32, t: [N] int32, proj_table: [max_len, H] float32
    (= emb_table @ W.T + b, precomputed once)."""
    N, H = x.shape
    max_len = proj_table.shape[0]

    tile_n = int(min(tile_n, N))
    if tile_n % 8 != 0:            # keep sublane-aligned tiles; tiny N -> one block
        tile_n = N
    grid = (pl.cdiv(N, tile_n),)

    t2 = t.astype(jnp.int32).reshape(N, 1)

    flops = 2 * N * max_len * H + N * H
    bytes_accessed = (2 * N * H + max_len * H) * 4 + N * 4

    return pl.pallas_call(
        _rte_kernel,
        out_shape=jax.ShapeDtypeStruct((N, H), x.dtype),
        grid=grid,
        in_specs=[
            pl.BlockSpec((tile_n, 1), lambda i: (i, 0)),        # t  (tiled over N)
            pl.BlockSpec((tile_n, H), lambda i: (i, 0)),        # x  (tiled over N)
            pl.BlockSpec((max_len, H), lambda i: (0, 0)),       # proj_table (resident)
        ],
        out_specs=pl.BlockSpec((tile_n, H), lambda i: (i, 0)),
        compiler_params=pltpu.CompilerParams(
            dimension_semantics=("parallel",),                  # 2 TCs on v7x
            vmem_limit_bytes=32 * 1024 * 1024,                  # headroom on v7x
        ),
        cost_estimate=pl.CostEstimate(
            flops=flops, transcendentals=0, bytes_accessed=bytes_accessed),
    )(t2, x, proj_table)


def make_sinusoid_table(max_len, n_hid, dtype=jnp.float32):
    """Replicates the PyTorch __init__ embedding table construction."""
    position = jnp.arange(0.0, max_len, dtype=jnp.float32)[:, None]          # (max_len, 1)
    div_term = jnp.exp(
        jnp.arange(0, n_hid, 2, dtype=jnp.float32) * -(math.log(10000.0) / n_hid)
    )                                                                         # (n_hid//2,)
    angles = position * div_term                                              # (max_len, n_hid//2)
    scale = 1.0 / math.sqrt(n_hid)
    table = jnp.zeros((max_len, n_hid), dtype=jnp.float32)
    table = table.at[:, 0::2].set(jnp.sin(angles) * scale)
    table = table.at[:, 1::2].set(jnp.cos(angles) * scale)
    return table.astype(dtype)


def precompute_projected_table(emb_table, w, b):
    """One-time (init-style) fold of the Linear into the fixed sinusoid table:
    proj_table = emb_table @ W.T + b, kept in accurate f32."""
    return (jnp.dot(emb_table, w.T, preferred_element_type=jnp.float32,
                    precision=jax.lax.Precision.HIGHEST) + b).astype(jnp.float32)


if __name__ == "__main__":
    # Small shapes consistent with the module: N nodes, hidden dim n_hid.
    N = 8
    n_hid = 32
    max_len = 240

    key = jax.random.PRNGKey(0)
    kx, kt, kw, kb = jax.random.split(key, 4)

    x = jax.random.normal(kx, (N, n_hid), dtype=jnp.float32)
    t = jax.random.randint(kt, (N,), 0, max_len, dtype=jnp.int32)

    # Deterministic Linear(n_hid, n_hid) params (PyTorch-style uniform init range).
    bound = 1.0 / math.sqrt(n_hid)
    w = jax.random.uniform(kw, (n_hid, n_hid), minval=-bound, maxval=bound,
                           dtype=jnp.float32)   # (out, in) like nn.Linear.weight
    b = jax.random.uniform(kb, (n_hid,), minval=-bound, maxval=bound,
                           dtype=jnp.float32)

    emb_table = make_sinusoid_table(max_len, n_hid)        # fixed, non-trainable
    proj_table = precompute_projected_table(emb_table, w, b)  # one-time fold of Linear

    out = rel_temporal_encoding(x, t, proj_table)
    out = jax.block_until_ready(out)

    # Reference check in plain JAX (module semantics: x + emb(t) @ W.T + b).
    ref = x + jnp.dot(emb_table[t], w.T,
                      precision=jax.lax.Precision.HIGHEST) + b
    assert out.shape == (N, n_hid)
    assert jnp.allclose(out, ref, atol=1e-5, rtol=1e-5), "mismatch vs reference"

    print("KERNEL_OK")
</pallas_src>

<mosaic_0001>
module attributes {stable_mosaic.version = 11 : i64} {
  func.func @_rte_kernel(%arg0: i32, %arg1: memref<8x1xi32, #tpu.memory_space<vmem>>, %arg2: memref<8x32xf32, #tpu.memory_space<vmem>>, %arg3: memref<240x32xf32, #tpu.memory_space<vmem>>, %arg4: memref<8x32xf32, #tpu.memory_space<vmem>>) attributes {dimension_semantics = [#tpu.dimension_semantics<parallel>], iteration_bounds = array<i64: 1>, scalar_prefetch = 0 : i64, scratch_operands = 0 : i64, tpu.core_type = #tpu.core_type<tc>, window_params = [{transform_indices = @transform_0, window_bounds = array<i64: 8, 1>}, {transform_indices = @transform_1, window_bounds = array<i64: 8, 32>}, {pipeline_mode = #tpu.pipeline_mode<synchronous>, transform_indices = @transform_2, window_bounds = array<i64: 240, 32>}, {transform_indices = @transform_3, window_bounds = array<i64: 8, 32>}]} {
    %0 = tpu.iota {dimensions = array<i32: 1>} : vector<8x240xi32>
    %c0 = arith.constant 0 : index
    %c0_0 = arith.constant 0 : index
    %1 = vector.load %arg1[%c0, %c0_0] : memref<8x1xi32, #tpu.memory_space<vmem>>, vector<8x1xi32>
    %2 = vector.broadcast %1 : vector<8x1xi32> to vector<8x240xi32>
    %3 = arith.cmpi eq, %2, %0 : vector<8x240xi32>
    %4 = arith.extui %3 : vector<8x240xi1> to vector<8x240xi32>
    %5 = arith.sitofp %4 : vector<8x240xi32> to vector<8x240xf32>
    %c0_1 = arith.constant 0 : index
    %c0_2 = arith.constant 0 : index
    %6 = vector.load %arg3[%c0_1, %c0_2] : memref<240x32xf32, #tpu.memory_space<vmem>>, vector<240x32xf32>
    %cst = arith.constant dense<0.000000e+00> : vector<8x32xf32>
    %7 = tpu.matmul %5, %6, %cst {dimension_numbers = #tpu.dot_dimension_numbers<[1], [0], [0], [1], [0, 0, 1, 1], [], []>} : vector<8x240xf32>, vector<240x32xf32>, vector<8x32xf32> -> vector<8x32xf32>
    %c0_3 = arith.constant 0 : index
    %c0_4 = arith.constant 0 : index
    %8 = vector.load %arg2[%c0_3, %c0_4] : memref<8x32xf32, #tpu.memory_space<vmem>>, vector<8x32xf32>
    %9 = arith.addf %8, %7 : vector<8x32xf32>
    %c0_5 = arith.constant 0 : index
    %c0_6 = arith.constant 0 : index
    %10 = vector.load %arg4[%c0_5, %c0_6] : memref<8x32xf32, #tpu.memory_space<vmem>>, vector<8x32xf32>
    tpu.vector_store %arg4[%c0_5, %c0_6], %9 {strides = array<i32>} : memref<8x32xf32, #tpu.memory_space<vmem>>, vector<8x32xf32>,
    return
  }
  func.func @transform_0(%arg0: i32) -> (i32, i32) {
    %c0_i32 = arith.constant 0 : i32
    %c0_i32_0 = arith.constant 0 : i32
    return %arg0, %c0_i32 : i32, i32
  }
  func.func @transform_1(%arg0: i32) -> (i32, i32) {
    %c0_i32 = arith.constant 0 : i32
    %c0_i32_0 = arith.constant 0 : i32
    return %arg0, %c0_i32 : i32, i32
  }
  func.func @transform_2(%arg0: i32) -> (i32, i32) {
    %c0_i32 = arith.constant 0 : i32
    %c0_i32_0 = arith.constant 0 : i32
    %c0_i32_1 = arith.constant 0 : i32
    return %c0_i32, %c0_i32_0 : i32, i32
  }
  func.func @transform_3(%arg0: i32) -> (i32, i32) {
    %c0_i32 = arith.constant 0 : i32
    %c0_i32_0 = arith.constant 0 : i32
    return %arg0, %c0_i32 : i32, i32
  }
}

</mosaic_0001>

<llo_original>
// kernel: tpu_custom_call.1
$region0: #{tpu_custom_call.1}
  #allocation0 [shape = 'u32[]', space=smem, size = 0x4, offset = 0x4, fixed_abs, tag = 'smem constant byte address 0x4 - core index']
  #allocation1 [shape = 'u32[144,128]{1,0:T(1,128)}', space=vmem, size = 0x12000, scoped, tag = 'internal scratch']
  %s0 = inlined_call_operand.vmem [shape: s32[8,1], index: 0, kind: input, shape index: {}]
  %s1 = inlined_call_operand.vmem [shape: f32[8,32], index: 1, kind: input, shape index: {}]
  %s2 = inlined_call_operand.vmem [shape: f32[240,32], index: 2, kind: input, shape index: {}]
  %s3 = inlined_call_operand.hbm [shape: f32[8,32], index: 3, kind: output, shape index: {}]
  %s4 = sld [smem:[#allocation0]]
  $region22: #{tpu_custom_call.1} parent=0
    _
  %s6 = ssub.s32 1, %s4
  %s7 = scalar_select 0, %s6, %s4
  $region1: #{tpu_custom_call.1} parent=0
    #allocation2 [shape = 'u8[4096]{0}', space=vmem, size = 0x1000, scoped, tag = 'output window, operand 0, single buffered']
    #allocation3 [shape = 's32[1]{0}', space=sflag, size = 0x4, scoped, tag = 'scoped memory for tpu_custom_call.1']
    %8 = vsyncpa [#allocation3], 0
    // Predicated region
    $region2: #{tpu_custom_call.1} parent=1 // pred_check
      _
    $region3: #{tpu_custom_call.1} parent=1 // pred_check_branch
      %10 = sbr.rel (0) target = $region5
    $region4: #{tpu_custom_call.1} parent=1 // pred_region
      _
    $region5: #{tpu_custom_call.1} parent=1 // pred_fallthru
      _
    // Predicated region
    $region6: #{tpu_custom_call.1} parent=1 // pred_check
      _
    $region7: #{tpu_custom_call.1} parent=1 // pred_check_branch
      %12 = sbr.rel (0) target = $region9
    $region8: #{tpu_custom_call.1} parent=1 // pred_region
      _
    $region9: #{tpu_custom_call.1} parent=1 // pred_fallthru
      _
    // Predicated region
    $region10: #{tpu_custom_call.1} parent=1 // pred_check
      _
    $region11: #{tpu_custom_call.1} parent=1 // pred_check_branch
      %14 = sbr.rel (0) target = $region13
    $region12: #{tpu_custom_call.1} parent=1 // pred_region
      _
    $region13: #{tpu_custom_call.1} parent=1 // pred_fallthru
      _
    %v15 = vlaneseq
    %v16 = vand.u32 %v15, 127
    %v17 = vadd.s32 %v16, 128
    %v18 = vld [vmem:[%s0] sm:$0xff]
    %19 = vset.pattern.permute.xlu0 0
    %20 = vperm.xlu0 %19, %v18
    %v21 = vpop.permute.xlu0 %20
    %vm22 = vcmp.eq.s32.totalorder %v21, %v16
    %vm23 = vcmp.eq.s32.totalorder %v21, %v17
    %v24 = vsel %vm22, 1, 0
    %v25 = vsel %vm23, 1, 0
    %v26 = vcvt.s32.f32 %v24
    %v27 = vcvt.s32.f32 %v25
    %v28 = vld [vmem:[%s2] sm:$0xff]
    %v29 = vld [vmem:[%s2 + $0x8] sm:$0xff]
    %v30 = vld [vmem:[%s2 + $0x10] sm:$0xff]
    %v31 = vld [vmem:[%s2 + $0x18] sm:$0xff]
    %v32 = vld [vmem:[%s2 + $0x20] sm:$0xff]
    %v33 = vld [vmem:[%s2 + $0x28] sm:$0xff]
    %v34 = vld [vmem:[%s2 + $0x30] sm:$0xff]
    %v35 = vld [vmem:[%s2 + $0x38] sm:$0xff]
    %v36 = vld [vmem:[%s2 + $0x40] sm:$0xff]
    %v37 = vld [vmem:[%s2 + $0x48] sm:$0xff]
    %v38 = vld [vmem:[%s2 + $0x50] sm:$0xff]
    %v39 = vld [vmem:[%s2 + $0x58] sm:$0xff]
    %v40 = vld [vmem:[%s2 + $0x60] sm:$0xff]
    %v41 = vld [vmem:[%s2 + $0x68] sm:$0xff]
    %v42 = vld [vmem:[%s2 + $0x70] sm:$0xff]
    %v43 = vld [vmem:[%s2 + $0x78] sm:$0xff]
    %v44 = vld [vmem:[%s2 + $0x80] sm:$0xff]
    %v45 = vld [vmem:[%s2 + $0x88] sm:$0xff]
    %v46 = vld [vmem:[%s2 + $0x90] sm:$0xff]
    %v47 = vld [vmem:[%s2 + $0x98] sm:$0xff]
    %v48 = vld [vmem:[%s2 + $0xa0] sm:$0xff]
    %v49 = vld [vmem:[%s2 + $0xa8] sm:$0xff]
    %v50 = vld [vmem:[%s2 + $0xb0] sm:$0xff]
    %v51 = vld [vmem:[%s2 + $0xb8] sm:$0xff]
    %v52 = vld [vmem:[%s2 + $0xc0] sm:$0xff]
    %v53 = vld [vmem:[%s2 + $0xc8] sm:$0xff]
    %v54 = vld [vmem:[%s2 + $0xd0] sm:$0xff]
    %v55 = vld [vmem:[%s2 + $0xd8] sm:$0xff]
    %v56 = vld [vmem:[%s2 + $0xe0] sm:$0xff]
    %v57 = vld [vmem:[%s2 + $0xe8] sm:$0xff]
    %vm58 = vcmask 916480
    %v60 = vsel %vm58, %v27, 0
    %62 = vmatprep.subr.mxu0 0.0
    %63 = vmatpush1.msra.mxu0 %v28
    %64 = vmatprep.subr.mxu0 0.0
    %65 = vmatpush1.msra.mxu0 %v29
    %66 = vmatprep.subr.mxu0 0.0
    %67 = vmatpush1.msra.mxu0 %v30
    %68 = vmatprep.subr.mxu0 0.0
    %69 = vmatpush1.msra.mxu0 %v31
    %70 = vmatprep.subr.mxu0 0.0
    %71 = vmatpush1.msra.mxu0 %v32
    %72 = vmatprep.subr.mxu0 0.0
    %73 = vmatpush1.msra.mxu0 %v33
    %74 = vmatprep.subr.mxu0 0.0
    %75 = vmatpush1.msra.mxu0 %v34
    %76 = vmatprep.subr.mxu0 0.0
    %77 = vmatpush1.msra.mxu0 %v35
    %78 = vmatprep.subr.mxu0 0.0
    %79 = vmatpush1.msra.mxu0 %v36
    %80 = vmatprep.subr.mxu0 0.0
    %81 = vmatpush1.msra.mxu0 %v37
    %82 = vmatprep.subr.mxu0 0.0
    %83 = vmatpush1.msra.mxu0 %v38
    %84 = vmatprep.subr.mxu0 0.0
    %85 = vmatpush1.msra.mxu0 %v39
    %86 = vmatprep.subr.mxu0 0.0
    %87 = vmatpush1.msra.mxu0 %v40
    %88 = vmatprep.subr.mxu0 0.0
    %89 = vmatpush1.msra.mxu0 %v41
    %90 = vmatprep.subr.mxu0 0.0
    %91 = vmatpush1.msra.mxu0 %v42
    %92 = vmatprep.subr.mxu0 0.0
    %93 = vmatpush1.msra.mxu0 %v43
    %94 = vmatprep.subr.mxu0 0.0
    %95 = vmatpush1.msra.mxu0 %v44
    %96 = vmatprep.subr.mxu0 0.0
    %97 = vmatpush1.msra.mxu0 %v45
    %98 = vmatprep.subr.mxu0 0.0
    %99 = vmatpush1.msra.mxu0 %v46
    %100 = vmatprep.subr.mxu0 0.0
    %101 = vmatpush1.msra.mxu0 %v47
    %102 = vmatprep.subr.mxu0 0.0
    %103 = vmatpush1.msra.mxu0 %v48
    %104 = vmatprep.subr.mxu0 0.0
    %105 = vmatpush1.msra.mxu0 %v49
    %106 = vmatprep.subr.mxu0 0.0
    %107 = vmatpush1.msra.mxu0 %v50
    %108 = vmatprep.subr.mxu0 0.0
    %109 = vmatpush1.msra.mxu0 %v51
    %110 = vmatprep.subr.mxu0 0.0
    %111 = vmatpush1.msra.mxu0 %v52
    %112 = vmatprep.subr.mxu0 0.0
    %113 = vmatpush1.msra.mxu0 %v53
    %114 = vmatprep.subr.mxu0 0.0
    %115 = vmatpush1.msra.mxu0 %v54
    %116 = vmatprep.subr.mxu0 0.0
    %117 = vmatpush1.msra.mxu0 %v55
    %118 = vmatprep.subr.mxu0 0.0
    %119 = vmatpush1.msra.mxu0 %v56
    %120 = vmatprep.subr.mxu0 0.0
    %121 = vmatpush1.msra.mxu0 %v57
    %122 = vmatprep.subr.mxu0 0.0
    %123 = vmatpush1.msra.mxu0 0.0
    %124 = vmatprep.subr.mxu0 0.0
    %125 = vmatpush1.msra.mxu0 0.0
    %126 = vmatprep.mubr.f32.mxu0 %v60
    %127 = vmatmul.mubr.f32.gmra.mrb[0].mxu0 %v26
    %v128 = vpop.f32.mrb[0].mxu0
    %v129 = vadd.f32 0.0, %v128
    %v130 = vpop.f32.mrb[0].mxu0
    %131 = vdwg.mxu0
    %v132 = vld [vmem:[%s1] sm:$0xff]
    %v133 = vadd.f32 %v132, %v129
    %vm134 = vcmask 261120
    %135 = vst.msk [vmem:[#allocation2] sm:$0xff] %vm134, %v133
    // Predicated region
    $region14: #{tpu_custom_call.1} parent=1 // pred_check
      _
    $region15: #{tpu_custom_call.1} parent=1 // pred_check_branch
      %137 = sbr.rel (0) target = $region17
    $region16: #{tpu_custom_call.1} parent=1 // pred_region
      %s139 = ssub.s32 128, 128
      %140 = vsyncadd [#allocation3], %s139
      %s142 = sshll.u32 [#allocation2], 4
      %s143 = int_to_ptr.vmem [resolvable:$true] %s142
      %145 = dma.vmem_to_hbm [thread:$0]  %s143, 128, %s3, [#allocation3]
    $region17: #{tpu_custom_call.1} parent=1 // pred_fallthru
      _
    // Predicated region
    $region18: #{tpu_custom_call.1} parent=1 // pred_check
      _
    $region19: #{tpu_custom_call.1} parent=1 // pred_check_branch
      %147 = sbr.rel (0) target = $region21
    $region20: #{tpu_custom_call.1} parent=1 // pred_region
      %148 = dma.done [#allocation3], 128
    $region21: #{tpu_custom_call.1} parent=1 // pred_fallthru
      _
    %149 = vsyncpa [#allocation3], 1

</llo_original>
